<compile_context>
chip_gen: v7x
topology: tpu7x:2x2x1
jax: 0.10.0
libtpu: 0.0.40
codegen_flags: <defaults>
</compile_context>

<pallas_src>
import jax
import jax.numpy as jnp
from jax.experimental import pallas as pl
from jax.experimental.pallas import tpu as pltpu


def _mlp_kernel(xT_ref, w1T_ref, b1_ref, w2_ref, b2_ref, outT_ref):
    """Fused MLP on a lane-dense (features, batch_tile) slab.

    xT_ref:   (D_IN,  TB)        VMEM   batch on the lane axis
    w1T_ref:  (D_HID, D_IN)      VMEM   fc1 weight (in,out)->transposed here
    b1_ref:   (D_HID, 1)         VMEM
    w2_ref:   (D_HID * D_OUT,)   SMEM   fc2 weight scalars, row-major (k, c)
    b2_ref:   (D_OUT,)           SMEM
    outT_ref: (D_OUT, TB)        VMEM
    """
    d_hid = w1T_ref.shape[0]
    d_out = b2_ref.shape[0]
    tb = xT_ref.shape[1]

    # fc1 + ReLU on the MXU: (D_HID, D_IN) @ (D_IN, TB) -> (D_HID, TB), lane-dense.
    hT = jnp.dot(w1T_ref[...], xT_ref[...], preferred_element_type=jnp.float32)
    hT = jnp.maximum(hT + b1_ref[...], 0.0)

    # fc2 on the VPU: each logit is D_HID broadcast-FMAs over B-wide rows
    # (SMEM scalar weights; keeps the tiny 2-wide matmul off the MXU/XLU).
    logits = [jnp.zeros((1, tb), jnp.float32) + b2_ref[c] for c in range(d_out)]
    for k in range(d_hid):
        hk = hT[k:k + 1, :]
        for c in range(d_out):
            logits[c] = logits[c] + w2_ref[k * d_out + c] * hk

    # log_softmax over the D_OUT rows, fully elementwise (numerically stable).
    m = logits[0]
    for c in range(1, d_out):
        m = jnp.maximum(m, logits[c])
    shifted = [l - m for l in logits]
    ssum = jnp.exp(shifted[0])
    for c in range(1, d_out):
        ssum = ssum + jnp.exp(shifted[c])
    lse = jnp.log(ssum)
    outT_ref[...] = jnp.concatenate(
        [s - lse for s in shifted], axis=0
    ).astype(outT_ref.dtype)


def _round_up(n, m):
    return ((n + m - 1) // m) * m


def classification_net_forward(x, w1, b1, w2, b2, *, max_batch_tile=1024):
    """x: (B, 10); w1: (10, 20); b1: (20,); w2: (20, 2); b2: (2,) -> (B, 2) f32 log-probs.

    Weights use (in_features, out_features) layout (transposed vs. PyTorch's Linear.weight).
    NOTE: a standalone pallas_call only pays off for B in the thousands; for tiny
    batches let XLA fuse the three ops or batch many rows per call.
    """
    B, d_in = x.shape
    d_hid = w1.shape[1]
    d_out = w2.shape[1]

    # Batch on the lane axis; pick a batch tile and pad B up to a multiple of it.
    tb = min(max_batch_tile, _round_up(max(B, 1), 128))
    b_pad = _round_up(B, tb)

    xT = jnp.pad(x.T, ((0, 0), (0, b_pad - B)))            # (d_in, b_pad), zero tail
    w1T = w1.T                                             # (d_hid, d_in)
    b1c = b1.reshape(d_hid, 1).astype(jnp.float32)         # (d_hid, 1)
    w2f = w2.reshape(-1).astype(jnp.float32)               # (d_hid*d_out,) SMEM scalars
    b2f = b2.reshape(-1).astype(jnp.float32)               # (d_out,)

    grid = (b_pad // tb,)
    cost = pl.CostEstimate(
        flops=2 * b_pad * d_in * d_hid + 2 * b_pad * d_hid * d_out,
        transcendentals=(d_out + 1) * b_pad,
        bytes_accessed=int(
            xT.size * xT.dtype.itemsize
            + w1T.size * w1T.dtype.itemsize
            + (b1c.size + w2f.size + b2f.size + d_out * b_pad) * 4
        ),
    )

    outT = pl.pallas_call(
        _mlp_kernel,
        out_shape=jax.ShapeDtypeStruct((d_out, b_pad), jnp.float32),
        grid=grid,
        in_specs=[
            pl.BlockSpec((d_in, tb), lambda i: (0, i)),          # x tile, streamed
            pl.BlockSpec((d_hid, d_in), lambda i: (0, 0)),       # fc1 weight, resident
            pl.BlockSpec((d_hid, 1), lambda i: (0, 0)),          # fc1 bias, resident
            pl.BlockSpec(memory_space=pltpu.MemorySpace.SMEM),   # fc2 weight scalars
            pl.BlockSpec(memory_space=pltpu.MemorySpace.SMEM),   # fc2 bias scalars
        ],
        out_specs=pl.BlockSpec((d_out, tb), lambda i: (0, i)),   # lane-dense output
        compiler_params=pltpu.CompilerParams(
            dimension_semantics=("parallel",)
        ),
        cost_estimate=cost,
    )(xT, w1T, b1c, w2f, b2f)

    return outT[:, :B].T  # back to PyTorch's (B, 2); padded rows dropped


if __name__ == "__main__":
    key = jax.random.PRNGKey(0)
    k_x, k_w1, k_b1, k_w2, k_b2 = jax.random.split(key, 5)

    B, D_IN, D_HID, D_OUT = 8, 10, 20, 2

    x = jax.random.normal(k_x, (B, D_IN), dtype=jnp.float32)

    # Deterministic param init (uniform like PyTorch's default Linear init bounds).
    bound1 = 1.0 / (D_IN ** 0.5)
    w1 = jax.random.uniform(k_w1, (D_IN, D_HID), jnp.float32, -bound1, bound1)
    b1 = jax.random.uniform(k_b1, (D_HID,), jnp.float32, -bound1, bound1)
    bound2 = 1.0 / (D_HID ** 0.5)
    w2 = jax.random.uniform(k_w2, (D_HID, D_OUT), jnp.float32, -bound2, bound2)
    b2 = jax.random.uniform(k_b2, (D_OUT,), jnp.float32, -bound2, bound2)

    out = jax.block_until_ready(classification_net_forward(x, w1, b1, w2, b2))

    # Pure-JAX reference. fc2 at HIGHEST precision to match the kernel's exact
    # f32 VPU FMAs; fc1 at default precision to match the kernel's MXU matmul.
    h = jnp.maximum(x @ w1 + b1, 0.0)
    logits = jnp.dot(h, w2, precision=jax.lax.Precision.HIGHEST) + b2
    ref = jax.nn.log_softmax(logits, axis=1)

    assert out.shape == (B, D_OUT)
    assert jnp.allclose(out, ref, atol=1e-4, rtol=1e-4), float(
        jnp.max(jnp.abs(out - ref))
    )

    print("KERNEL_OK")
</pallas_src>

<mosaic_0001>
module attributes {stable_mosaic.version = 11 : i64} {
  func.func @_mlp_kernel(%arg0: i32, %arg1: memref<10x128xf32, #tpu.memory_space<vmem>>, %arg2: memref<20x10xf32, #tpu.memory_space<vmem>>, %arg3: memref<20x1xf32, #tpu.memory_space<vmem>>, %arg4: memref<40xf32, #tpu.memory_space<smem>>, %arg5: memref<2xf32, #tpu.memory_space<smem>>, %arg6: memref<2x128xf32, #tpu.memory_space<vmem>>) attributes {dimension_semantics = [#tpu.dimension_semantics<parallel>], iteration_bounds = array<i64: 1>, scalar_prefetch = 0 : i64, scratch_operands = 0 : i64, tpu.core_type = #tpu.core_type<tc>, window_params = [{transform_indices = @transform_0, window_bounds = array<i64: 10, 128>}, {pipeline_mode = #tpu.pipeline_mode<synchronous>, transform_indices = @transform_1, window_bounds = array<i64: 20, 10>}, {pipeline_mode = #tpu.pipeline_mode<synchronous>, transform_indices = @transform_2, window_bounds = array<i64: 20, 1>}, {transform_indices = @transform_3, window_bounds = array<i64: 40>}, {transform_indices = @transform_4, window_bounds = array<i64: 2>}, {transform_indices = @transform_5, window_bounds = array<i64: 2, 128>}]} {
    %c0 = arith.constant 0 : index
    %c0_0 = arith.constant 0 : index
    %0 = vector.load %arg2[%c0, %c0_0] : memref<20x10xf32, #tpu.memory_space<vmem>>, vector<20x10xf32>
    %c0_1 = arith.constant 0 : index
    %c0_2 = arith.constant 0 : index
    %1 = vector.load %arg1[%c0_1, %c0_2] : memref<10x128xf32, #tpu.memory_space<vmem>>, vector<10x128xf32>
    %cst = arith.constant dense<0.000000e+00> : vector<20x128xf32>
    %2 = tpu.matmul %0, %1, %cst {dimension_numbers = #tpu.dot_dimension_numbers<[1], [0], [0], [1], [0, 0, 1, 1], [], []>} : vector<20x10xf32>, vector<10x128xf32>, vector<20x128xf32> -> vector<20x128xf32>
    %c0_3 = arith.constant 0 : index
    %c0_4 = arith.constant 0 : index
    %3 = vector.load %arg3[%c0_3, %c0_4] : memref<20x1xf32, #tpu.memory_space<vmem>>, vector<20x1xf32>
    %4 = vector.broadcast %3 : vector<20x1xf32> to vector<20x128xf32>
    %5 = arith.addf %2, %4 : vector<20x128xf32>
    %cst_5 = arith.constant 0.000000e+00 : f32
    %6 = vector.broadcast %cst_5 : f32 to vector<20x128xf32>
    %7 = arith.maximumf %5, %6 : vector<20x128xf32>
    %cst_6 = arith.constant 0.000000e+00 : f32
    %8 = vector.broadcast %cst_6 : f32 to vector<1x128xf32>
    %c0_7 = arith.constant 0 : index
    %9 = memref.load %arg5[%c0_7] : memref<2xf32, #tpu.memory_space<smem>>
    %10 = vector.broadcast %9 : f32 to vector<1x128xf32>
    %11 = arith.addf %8, %10 : vector<1x128xf32>
    %cst_8 = arith.constant 0.000000e+00 : f32
    %12 = vector.broadcast %cst_8 : f32 to vector<1x128xf32>
    %c1 = arith.constant 1 : index
    %13 = memref.load %arg5[%c1] : memref<2xf32, #tpu.memory_space<smem>>
    %14 = vector.broadcast %13 : f32 to vector<1x128xf32>
    %15 = arith.addf %12, %14 : vector<1x128xf32>
    %16 = vector.extract_strided_slice %7 {offsets = [0, 0], sizes = [1, 128], strides = [1, 1]} : vector<20x128xf32> to vector<1x128xf32>
    %c0_9 = arith.constant 0 : index
    %17 = memref.load %arg4[%c0_9] : memref<40xf32, #tpu.memory_space<smem>>
    %18 = vector.broadcast %17 : f32 to vector<1x128xf32>
    %19 = arith.mulf %18, %16 : vector<1x128xf32>
    %20 = arith.addf %11, %19 : vector<1x128xf32>
    %c1_10 = arith.constant 1 : index
    %21 = memref.load %arg4[%c1_10] : memref<40xf32, #tpu.memory_space<smem>>
    %22 = vector.broadcast %21 : f32 to vector<1x128xf32>
    %23 = arith.mulf %22, %16 : vector<1x128xf32>
    %24 = arith.addf %15, %23 : vector<1x128xf32>
    %25 = vector.extract_strided_slice %7 {offsets = [1, 0], sizes = [1, 128], strides = [1, 1]} : vector<20x128xf32> to vector<1x128xf32>
    %c2 = arith.constant 2 : index
    %26 = memref.load %arg4[%c2] : memref<40xf32, #tpu.memory_space<smem>>
    %27 = vector.broadcast %26 : f32 to vector<1x128xf32>
    %28 = arith.mulf %27, %25 : vector<1x128xf32>
    %29 = arith.addf %20, %28 : vector<1x128xf32>
    %c3 = arith.constant 3 : index
    %30 = memref.load %arg4[%c3] : memref<40xf32, #tpu.memory_space<smem>>
    %31 = vector.broadcast %30 : f32 to vector<1x128xf32>
    %32 = arith.mulf %31, %25 : vector<1x128xf32>
    %33 = arith.addf %24, %32 : vector<1x128xf32>
    %34 = vector.extract_strided_slice %7 {offsets = [2, 0], sizes = [1, 128], strides = [1, 1]} : vector<20x128xf32> to vector<1x128xf32>
    %c4 = arith.constant 4 : index
    %35 = memref.load %arg4[%c4] : memref<40xf32, #tpu.memory_space<smem>>
    %36 = vector.broadcast %35 : f32 to vector<1x128xf32>
    %37 = arith.mulf %36, %34 : vector<1x128xf32>
    %38 = arith.addf %29, %37 : vector<1x128xf32>
    %c5 = arith.constant 5 : index
    %39 = memref.load %arg4[%c5] : memref<40xf32, #tpu.memory_space<smem>>
    %40 = vector.broadcast %39 : f32 to vector<1x128xf32>
    %41 = arith.mulf %40, %34 : vector<1x128xf32>
    %42 = arith.addf %33, %41 : vector<1x128xf32>
    %43 = vector.extract_strided_slice %7 {offsets = [3, 0], sizes = [1, 128], strides = [1, 1]} : vector<20x128xf32> to vector<1x128xf32>
    %c6 = arith.constant 6 : index
    %44 = memref.load %arg4[%c6] : memref<40xf32, #tpu.memory_space<smem>>
    %45 = vector.broadcast %44 : f32 to vector<1x128xf32>
    %46 = arith.mulf %45, %43 : vector<1x128xf32>
    %47 = arith.addf %38, %46 : vector<1x128xf32>
    %c7 = arith.constant 7 : index
    %48 = memref.load %arg4[%c7] : memref<40xf32, #tpu.memory_space<smem>>
    %49 = vector.broadcast %48 : f32 to vector<1x128xf32>
    %50 = arith.mulf %49, %43 : vector<1x128xf32>
    %51 = arith.addf %42, %50 : vector<1x128xf32>
    %52 = vector.extract_strided_slice %7 {offsets = [4, 0], sizes = [1, 128], strides = [1, 1]} : vector<20x128xf32> to vector<1x128xf32>
    %c8 = arith.constant 8 : index
    %53 = memref.load %arg4[%c8] : memref<40xf32, #tpu.memory_space<smem>>
    %54 = vector.broadcast %53 : f32 to vector<1x128xf32>
    %55 = arith.mulf %54, %52 : vector<1x128xf32>
    %56 = arith.addf %47, %55 : vector<1x128xf32>
    %c9 = arith.constant 9 : index
    %57 = memref.load %arg4[%c9] : memref<40xf32, #tpu.memory_space<smem>>
    %58 = vector.broadcast %57 : f32 to vector<1x128xf32>
    %59 = arith.mulf %58, %52 : vector<1x128xf32>
    %60 = arith.addf %51, %59 : vector<1x128xf32>
    %61 = vector.extract_strided_slice %7 {offsets = [5, 0], sizes = [1, 128], strides = [1, 1]} : vector<20x128xf32> to vector<1x128xf32>
    %c10 = arith.constant 10 : index
    %62 = memref.load %arg4[%c10] : memref<40xf32, #tpu.memory_space<smem>>
    %63 = vector.broadcast %62 : f32 to vector<1x128xf32>
    %64 = arith.mulf %63, %61 : vector<1x128xf32>
    %65 = arith.addf %56, %64 : vector<1x128xf32>
    %c11 = arith.constant 11 : index
    %66 = memref.load %arg4[%c11] : memref<40xf32, #tpu.memory_space<smem>>
    %67 = vector.broadcast %66 : f32 to vector<1x128xf32>
    %68 = arith.mulf %67, %61 : vector<1x128xf32>
    %69 = arith.addf %60, %68 : vector<1x128xf32>
    %70 = vector.extract_strided_slice %7 {offsets = [6, 0], sizes = [1, 128], strides = [1, 1]} : vector<20x128xf32> to vector<1x128xf32>
    %c12 = arith.constant 12 : index
    %71 = memref.load %arg4[%c12] : memref<40xf32, #tpu.memory_space<smem>>
    %72 = vector.broadcast %71 : f32 to vector<1x128xf32>
    %73 = arith.mulf %72, %70 : vector<1x128xf32>
    %74 = arith.addf %65, %73 : vector<1x128xf32>
    %c13 = arith.constant 13 : index
    %75 = memref.load %arg4[%c13] : memref<40xf32, #tpu.memory_space<smem>>
    %76 = vector.broadcast %75 : f32 to vector<1x128xf32>
    %77 = arith.mulf %76, %70 : vector<1x128xf32>
    %78 = arith.addf %69, %77 : vector<1x128xf32>
    %79 = vector.extract_strided_slice %7 {offsets = [7, 0], sizes = [1, 128], strides = [1, 1]} : vector<20x128xf32> to vector<1x128xf32>
    %c14 = arith.constant 14 : index
    %80 = memref.load %arg4[%c14] : memref<40xf32, #tpu.memory_space<smem>>
    %81 = vector.broadcast %80 : f32 to vector<1x128xf32>
    %82 = arith.mulf %81, %79 : vector<1x128xf32>
    %83 = arith.addf %74, %82 : vector<1x128xf32>
    %c15 = arith.constant 15 : index
    %84 = memref.load %arg4[%c15] : memref<40xf32, #tpu.memory_space<smem>>
    %85 = vector.broadcast %84 : f32 to vector<1x128xf32>
    %86 = arith.mulf %85, %79 : vector<1x128xf32>
    %87 = arith.addf %78, %86 : vector<1x128xf32>
    %88 = vector.extract_strided_slice %7 {offsets = [8, 0], sizes = [1, 128], strides = [1, 1]} : vector<20x128xf32> to vector<1x128xf32>
    %c16 = arith.constant 16 : index
    %89 = memref.load %arg4[%c16] : memref<40xf32, #tpu.memory_space<smem>>
    %90 = vector.broadcast %89 : f32 to vector<1x128xf32>
    %91 = arith.mulf %90, %88 : vector<1x128xf32>
    %92 = arith.addf %83, %91 : vector<1x128xf32>
    %c17 = arith.constant 17 : index
    %93 = memref.load %arg4[%c17] : memref<40xf32, #tpu.memory_space<smem>>
    %94 = vector.broadcast %93 : f32 to vector<1x128xf32>
    %95 = arith.mulf %94, %88 : vector<1x128xf32>
    %96 = arith.addf %87, %95 : vector<1x128xf32>
    %97 = vector.extract_strided_slice %7 {offsets = [9, 0], sizes = [1, 128], strides = [1, 1]} : vector<20x128xf32> to vector<1x128xf32>
    %c18 = arith.constant 18 : index
    %98 = memref.load %arg4[%c18] : memref<40xf32, #tpu.memory_space<smem>>
    %99 = vector.broadcast %98 : f32 to vector<1x128xf32>
    %100 = arith.mulf %99, %97 : vector<1x128xf32>
    %101 = arith.addf %92, %100 : vector<1x128xf32>
    %c19 = arith.constant 19 : index
    %102 = memref.load %arg4[%c19] : memref<40xf32, #tpu.memory_space<smem>>
    %103 = vector.broadcast %102 : f32 to vector<1x128xf32>
    %104 = arith.mulf %103, %97 : vector<1x128xf32>
    %105 = arith.addf %96, %104 : vector<1x128xf32>
    %106 = vector.extract_strided_slice %7 {offsets = [10, 0], sizes = [1, 128], strides = [1, 1]} : vector<20x128xf32> to vector<1x128xf32>
    %c20 = arith.constant 20 : index
    %107 = memref.load %arg4[%c20] : memref<40xf32, #tpu.memory_space<smem>>
    %108 = vector.broadcast %107 : f32 to vector<1x128xf32>
    %109 = arith.mulf %108, %106 : vector<1x128xf32>
    %110 = arith.addf %101, %109 : vector<1x128xf32>
    %c21 = arith.constant 21 : index
    %111 = memref.load %arg4[%c21] : memref<40xf32, #tpu.memory_space<smem>>
    %112 = vector.broadcast %111 : f32 to vector<1x128xf32>
    %113 = arith.mulf %112, %106 : vector<1x128xf32>
    %114 = arith.addf %105, %113 : vector<1x128xf32>
    %115 = vector.extract_strided_slice %7 {offsets = [11, 0], sizes = [1, 128], strides = [1, 1]} : vector<20x128xf32> to vector<1x128xf32>
    %c22 = arith.constant 22 : index
    %116 = memref.load %arg4[%c22] : memref<40xf32, #tpu.memory_space<smem>>
    %117 = vector.broadcast %116 : f32 to vector<1x128xf32>
    %118 = arith.mulf %117, %115 : vector<1x128xf32>
    %119 = arith.addf %110, %118 : vector<1x128xf32>
    %c23 = arith.constant 23 : index
    %120 = memref.load %arg4[%c23] : memref<40xf32, #tpu.memory_space<smem>>
    %121 = vector.broadcast %120 : f32 to vector<1x128xf32>
    %122 = arith.mulf %121, %115 : vector<1x128xf32>
    %123 = arith.addf %114, %122 : vector<1x128xf32>
    %124 = vector.extract_strided_slice %7 {offsets = [12, 0], sizes = [1, 128], strides = [1, 1]} : vector<20x128xf32> to vector<1x128xf32>
    %c24 = arith.constant 24 : index
    %125 = memref.load %arg4[%c24] : memref<40xf32, #tpu.memory_space<smem>>
    %126 = vector.broadcast %125 : f32 to vector<1x128xf32>
    %127 = arith.mulf %126, %124 : vector<1x128xf32>
    %128 = arith.addf %119, %127 : vector<1x128xf32>
    %c25 = arith.constant 25 : index
    %129 = memref.load %arg4[%c25] : memref<40xf32, #tpu.memory_space<smem>>
    %130 = vector.broadcast %129 : f32 to vector<1x128xf32>
    %131 = arith.mulf %130, %124 : vector<1x128xf32>
    %132 = arith.addf %123, %131 : vector<1x128xf32>
    %133 = vector.extract_strided_slice %7 {offsets = [13, 0], sizes = [1, 128], strides = [1, 1]} : vector<20x128xf32> to vector<1x128xf32>
    %c26 = arith.constant 26 : index
    %134 = memref.load %arg4[%c26] : memref<40xf32, #tpu.memory_space<smem>>
    %135 = vector.broadcast %134 : f32 to vector<1x128xf32>
    %136 = arith.mulf %135, %133 : vector<1x128xf32>
    %137 = arith.addf %128, %136 : vector<1x128xf32>
    %c27 = arith.constant 27 : index
    %138 = memref.load %arg4[%c27] : memref<40xf32, #tpu.memory_space<smem>>
    %139 = vector.broadcast %138 : f32 to vector<1x128xf32>
    %140 = arith.mulf %139, %133 : vector<1x128xf32>
    %141 = arith.addf %132, %140 : vector<1x128xf32>
    %142 = vector.extract_strided_slice %7 {offsets = [14, 0], sizes = [1, 128], strides = [1, 1]} : vector<20x128xf32> to vector<1x128xf32>
    %c28 = arith.constant 28 : index
    %143 = memref.load %arg4[%c28] : memref<40xf32, #tpu.memory_space<smem>>
    %144 = vector.broadcast %143 : f32 to vector<1x128xf32>
    %145 = arith.mulf %144, %142 : vector<1x128xf32>
    %146 = arith.addf %137, %145 : vector<1x128xf32>
    %c29 = arith.constant 29 : index
    %147 = memref.load %arg4[%c29] : memref<40xf32, #tpu.memory_space<smem>>
    %148 = vector.broadcast %147 : f32 to vector<1x128xf32>
    %149 = arith.mulf %148, %142 : vector<1x128xf32>
    %150 = arith.addf %141, %149 : vector<1x128xf32>
    %151 = vector.extract_strided_slice %7 {offsets = [15, 0], sizes = [1, 128], strides = [1, 1]} : vector<20x128xf32> to vector<1x128xf32>
    %c30 = arith.constant 30 : index
    %152 = memref.load %arg4[%c30] : memref<40xf32, #tpu.memory_space<smem>>
    %153 = vector.broadcast %152 : f32 to vector<1x128xf32>
    %154 = arith.mulf %153, %151 : vector<1x128xf32>
    %155 = arith.addf %146, %154 : vector<1x128xf32>
    %c31 = arith.constant 31 : index
    %156 = memref.load %arg4[%c31] : memref<40xf32, #tpu.memory_space<smem>>
    %157 = vector.broadcast %156 : f32 to vector<1x128xf32>
    %158 = arith.mulf %157, %151 : vector<1x128xf32>
    %159 = arith.addf %150, %158 : vector<1x128xf32>
    %160 = vector.extract_strided_slice %7 {offsets = [16, 0], sizes = [1, 128], strides = [1, 1]} : vector<20x128xf32> to vector<1x128xf32>
    %c32 = arith.constant 32 : index
    %161 = memref.load %arg4[%c32] : memref<40xf32, #tpu.memory_space<smem>>
    %162 = vector.broadcast %161 : f32 to vector<1x128xf32>
    %163 = arith.mulf %162, %160 : vector<1x128xf32>
    %164 = arith.addf %155, %163 : vector<1x128xf32>
    %c33 = arith.constant 33 : index
    %165 = memref.load %arg4[%c33] : memref<40xf32, #tpu.memory_space<smem>>
    %166 = vector.broadcast %165 : f32 to vector<1x128xf32>
    %167 = arith.mulf %166, %160 : vector<1x128xf32>
    %168 = arith.addf %159, %167 : vector<1x128xf32>
    %169 = vector.extract_strided_slice %7 {offsets = [17, 0], sizes = [1, 128], strides = [1, 1]} : vector<20x128xf32> to vector<1x128xf32>
    %c34 = arith.constant 34 : index
    %170 = memref.load %arg4[%c34] : memref<40xf32, #tpu.memory_space<smem>>
    %171 = vector.broadcast %170 : f32 to vector<1x128xf32>
    %172 = arith.mulf %171, %169 : vector<1x128xf32>
    %173 = arith.addf %164, %172 : vector<1x128xf32>
    %c35 = arith.constant 35 : index
    %174 = memref.load %arg4[%c35] : memref<40xf32, #tpu.memory_space<smem>>
    %175 = vector.broadcast %174 : f32 to vector<1x128xf32>
    %176 = arith.mulf %175, %169 : vector<1x128xf32>
    %177 = arith.addf %168, %176 : vector<1x128xf32>
    %178 = vector.extract_strided_slice %7 {offsets = [18, 0], sizes = [1, 128], strides = [1, 1]} : vector<20x128xf32> to vector<1x128xf32>
    %c36 = arith.constant 36 : index
    %179 = memref.load %arg4[%c36] : memref<40xf32, #tpu.memory_space<smem>>
    %180 = vector.broadcast %179 : f32 to vector<1x128xf32>
    %181 = arith.mulf %180, %178 : vector<1x128xf32>
    %182 = arith.addf %173, %181 : vector<1x128xf32>
    %c37 = arith.constant 37 : index
    %183 = memref.load %arg4[%c37] : memref<40xf32, #tpu.memory_space<smem>>
    %184 = vector.broadcast %183 : f32 to vector<1x128xf32>
    %185 = arith.mulf %184, %178 : vector<1x128xf32>
    %186 = arith.addf %177, %185 : vector<1x128xf32>
    %187 = vector.extract_strided_slice %7 {offsets = [19, 0], sizes = [1, 128], strides = [1, 1]} : vector<20x128xf32> to vector<1x128xf32>
    %c38 = arith.constant 38 : index
    %188 = memref.load %arg4[%c38] : memref<40xf32, #tpu.memory_space<smem>>
    %189 = vector.broadcast %188 : f32 to vector<1x128xf32>
    %190 = arith.mulf %189, %187 : vector<1x128xf32>
    %191 = arith.addf %182, %190 : vector<1x128xf32>
    %c39 = arith.constant 39 : index
    %192 = memref.load %arg4[%c39] : memref<40xf32, #tpu.memory_space<smem>>
    %193 = vector.broadcast %192 : f32 to vector<1x128xf32>
    %194 = arith.mulf %193, %187 : vector<1x128xf32>
    %195 = arith.addf %186, %194 : vector<1x128xf32>
    %196 = arith.maximumf %191, %195 : vector<1x128xf32>
    %197 = arith.subf %191, %196 : vector<1x128xf32>
    %198 = arith.subf %195, %196 : vector<1x128xf32>
    %199 = math.exp %197 : vector<1x128xf32>
    %200 = math.exp %198 : vector<1x128xf32>
    %201 = arith.addf %199, %200 : vector<1x128xf32>
    %202 = math.log %201 : vector<1x128xf32>
    %203 = arith.subf %197, %202 : vector<1x128xf32>
    %204 = arith.subf %198, %202 : vector<1x128xf32>
    %205 = tpu.concatenate %203, %204 in 0 : vector<1x128xf32>, vector<1x128xf32> -> vector<2x128xf32>
    %c0_11 = arith.constant 0 : index
    %c0_12 = arith.constant 0 : index
    %206 = vector.load %arg6[%c0_11, %c0_12] : memref<2x128xf32, #tpu.memory_space<vmem>>, vector<2x128xf32>
    tpu.vector_store %arg6[%c0_11, %c0_12], %205 {strides = array<i32>} : memref<2x128xf32, #tpu.memory_space<vmem>>, vector<2x128xf32>,
    return
  }
  func.func @transform_0(%arg0: i32) -> (i32, i32) {
    %c0_i32 = arith.constant 0 : i32
    %c0_i32_0 = arith.constant 0 : i32
    return %c0_i32, %arg0 : i32, i32
  }
  func.func @transform_1(%arg0: i32) -> (i32, i32) {
    %c0_i32 = arith.constant 0 : i32
    %c0_i32_0 = arith.constant 0 : i32
    %c0_i32_1 = arith.constant 0 : i32
    return %c0_i32, %c0_i32_0 : i32, i32
  }
  func.func @transform_2(%arg0: i32) -> (i32, i32) {
    %c0_i32 = arith.constant 0 : i32
    %c0_i32_0 = arith.constant 0 : i32
    %c0_i32_1 = arith.constant 0 : i32
    return %c0_i32, %c0_i32_0 : i32, i32
  }
  func.func @transform_3(%arg0: i32) -> i32 {
    %c0_i32 = arith.constant 0 : i32
    %c0_i32_0 = arith.constant 0 : i32
    return %c0_i32 : i32
  }
  func.func @transform_4(%arg0: i32) -> i32 {
    %c0_i32 = arith.constant 0 : i32
    %c0_i32_0 = arith.constant 0 : i32
    return %c0_i32 : i32
  }
  func.func @transform_5(%arg0: i32) -> (i32, i32) {
    %c0_i32 = arith.constant 0 : i32
    %c0_i32_0 = arith.constant 0 : i32
    return %c0_i32, %arg0 : i32, i32
  }
}

</mosaic_0001>

<llo_original>
// kernel: tpu_custom_call.1
$region0: #{tpu_custom_call.1}
  #allocation0 [shape = 'u32[]', space=smem, size = 0x4, offset = 0x4, fixed_abs, tag = 'smem constant byte address 0x4 - core index']
  #allocation1 [shape = 'u32[144,128]{1,0:T(1,128)}', space=vmem, size = 0x12000, scoped, tag = 'internal scratch']
  %s0 = inlined_call_operand.vmem [shape: f32[10,128], index: 0, kind: input, shape index: {}]
  %s1 = inlined_call_operand.vmem [shape: f32[20,10], index: 1, kind: input, shape index: {}]
  %s2 = inlined_call_operand.vmem [shape: f32[20,1], index: 2, kind: input, shape index: {}]
  %s3 = inlined_call_operand.vmem [shape: f32[40], index: 3, kind: input, shape index: {}]
  %s4 = inlined_call_operand.vmem [shape: f32[2], index: 4, kind: input, shape index: {}]
  %s5 = inlined_call_operand.hbm [shape: f32[2,128], index: 5, kind: output, shape index: {}]
  %s6 = sld [smem:[#allocation0]]
  $region38: #{tpu_custom_call.1} parent=0
    _
  %s8 = ssub.s32 1, %s6
  %s9 = scalar_select 0, %s8, %s6
  $region1: #{tpu_custom_call.1} parent=0
    #allocation2 [shape = 'u8[512]{0}', space=smem, size = 0x200, scoped, tag = 'input window, operand 3, single buffered']
    #allocation3 [shape = 's32[1]{0}', space=sflag, size = 0x4, scoped, tag = 'scoped memory for tpu_custom_call.1']
    #allocation4 [shape = 's32[1]{0}', space=sflag, size = 0x4, scoped, tag = 'scoped memory for tpu_custom_call.1']
    #allocation5 [shape = 'u8[512]{0}', space=smem, size = 0x200, scoped, tag = 'input window, operand 4, single buffered']
    #allocation6 [shape = 's32[1]{0}', space=sflag, size = 0x4, scoped, tag = 'scoped memory for tpu_custom_call.1']
    #allocation7 [shape = 'u8[1024]{0}', space=vmem, size = 0x400, scoped, tag = 'output window, operand 0, single buffered']
    %10 = vsyncpa [#allocation4], 0
    %11 = vsyncpa [#allocation6], 0
    %12 = vsyncpa [#allocation3], 0
    // Predicated region
    $region2: #{tpu_custom_call.1} parent=1 // pred_check
      _
    $region3: #{tpu_custom_call.1} parent=1 // pred_check_branch
      %14 = sbr.rel (0) target = $region5
    $region4: #{tpu_custom_call.1} parent=1 // pred_region
      _
    $region5: #{tpu_custom_call.1} parent=1 // pred_fallthru
      _
    // Predicated region
    $region6: #{tpu_custom_call.1} parent=1 // pred_check
      _
    $region7: #{tpu_custom_call.1} parent=1 // pred_check_branch
      %16 = sbr.rel (0) target = $region9
    $region8: #{tpu_custom_call.1} parent=1 // pred_region
      _
    $region9: #{tpu_custom_call.1} parent=1 // pred_fallthru
      _
    // Predicated region
    $region10: #{tpu_custom_call.1} parent=1 // pred_check
      _
    $region11: #{tpu_custom_call.1} parent=1 // pred_check_branch
      %18 = sbr.rel (0) target = $region13
    $region12: #{tpu_custom_call.1} parent=1 // pred_region
      _
    $region13: #{tpu_custom_call.1} parent=1 // pred_fallthru
      _
    // Predicated region
    $region14: #{tpu_custom_call.1} parent=1 // pred_check
      _
    $region15: #{tpu_custom_call.1} parent=1 // pred_check_branch
      %20 = sbr.rel (0) target = $region17
    $region16: #{tpu_custom_call.1} parent=1 // pred_region
      %s22 = ssub.s32 16, 16
      %23 = vsyncadd [#allocation4], %s22
      %s25 = sshll.u32 %s3, 4
      %s26 = int_to_ptr.vmem [resolvable:$true] %s25
      %28 = dma.vmem_to_smem %s26, 16, [#allocation2], [#allocation4]
    $region17: #{tpu_custom_call.1} parent=1 // pred_fallthru
      _
    // Predicated region
    $region18: #{tpu_custom_call.1} parent=1 // pred_check
      _
    $region19: #{tpu_custom_call.1} parent=1 // pred_check_branch
      %30 = sbr.rel (0) target = $region21
    $region20: #{tpu_custom_call.1} parent=1 // pred_region
      %s32 = ssub.s32 16, 16
      %33 = vsyncadd [#allocation6], %s32
      %s35 = sshll.u32 %s4, 4
      %s36 = int_to_ptr.vmem [resolvable:$true] %s35
      %38 = dma.vmem_to_smem %s36, 16, [#allocation5], [#allocation6]
    $region21: #{tpu_custom_call.1} parent=1 // pred_fallthru
      _
    // Predicated region
    $region22: #{tpu_custom_call.1} parent=1 // pred_check
      _
    $region23: #{tpu_custom_call.1} parent=1 // pred_check_branch
      %40 = sbr.rel (0) target = $region25
    $region24: #{tpu_custom_call.1} parent=1 // pred_region
      %41 = dma.done [#allocation4], 16
    $region25: #{tpu_custom_call.1} parent=1 // pred_fallthru
      _
    // Predicated region
    $region26: #{tpu_custom_call.1} parent=1 // pred_check
      _
    $region27: #{tpu_custom_call.1} parent=1 // pred_check_branch
      %43 = sbr.rel (0) target = $region29
    $region28: #{tpu_custom_call.1} parent=1 // pred_region
      %44 = dma.done [#allocation6], 16
    $region29: #{tpu_custom_call.1} parent=1 // pred_fallthru
      _
    %45 = sfence
    %v46 = vld [vmem:[%s1] sm:$0xff]
    %v47 = vld [vmem:[%s1 + $0x8] sm:$0xff]
    %v48 = vld [vmem:[%s1 + $0x10] sm:$0xf]
    %v49 = vld [vmem:[%s0] sm:$0xff]
    %v50 = vld [vmem:[%s0 + $0x8] sm:$0x3]
    %v51 = vld [vmem:[%s2] sm:$0xff]
    %v52 = vld [vmem:[%s2 + $0x8] sm:$0xff]
    %v53 = vld [vmem:[%s2 + $0x10] sm:$0xf]
    %55 = vset.pattern.permute.xlu0 0
    %56 = vperm.xlu0 %55, %v51
    %v57 = vpop.permute.xlu0 %56
    %60 = vset.pattern.permute.xlu0 0
    %61 = vperm.xlu0 %60, %v52
    %v62 = vpop.permute.xlu0 %61
    %65 = vset.pattern.permute.xlu0 0
    %66 = vperm.xlu0 %65, %v53
    %v67 = vpop.permute.xlu0 %66
    %vm69 = vcmask 80896
    %v71 = vsel %vm69, %v46, 0
    %v74 = vsel %vm69, %v47, 0
    %v77 = vsel %vm69, %v48, 0
    %vm79 = vcmask 1041408
    %v81 = vsel %vm79, %v50, 0
    %83 = vmatprep.subr.mxu0 0.0
    %84 = vmatpush1.msra.mxu0 %v49
    %85 = vmatprep.subr.mxu0 0.0
    %86 = vmatpush1.msra.mxu0 %v81
    %87 = vmatprep.subr.mxu0 0.0
    %88 = vmatpush1.msra.mxu0 0.0
    %89 = vmatprep.subr.mxu0 0.0
    %90 = vmatpush1.msra.mxu0 0.0
    %91 = vmatprep.subr.mxu0 0.0
    %92 = vmatpush1.msra.mxu0 0.0
    %93 = vmatprep.subr.mxu0 0.0
    %94 = vmatpush1.msra.mxu0 0.0
    %95 = vmatprep.subr.mxu0 0.0
    %96 = vmatpush1.msra.mxu0 0.0
    %97 = vmatprep.subr.mxu0 0.0
    %98 = vmatpush1.msra.mxu0 0.0
    %99 = vmatprep.subr.mxu0 0.0
    %100 = vmatpush1.msra.mxu0 0.0
    %101 = vmatprep.subr.mxu0 0.0
    %102 = vmatpush1.msra.mxu0 0.0
    %103 = vmatprep.subr.mxu0 0.0
    %104 = vmatpush1.msra.mxu0 0.0
    %105 = vmatprep.subr.mxu0 0.0
    %106 = vmatpush1.msra.mxu0 0.0
    %107 = vmatprep.subr.mxu0 0.0
    %108 = vmatpush1.msra.mxu0 0.0
    %109 = vmatprep.subr.mxu0 0.0
    %110 = vmatpush1.msra.mxu0 0.0
    %111 = vmatprep.subr.mxu0 0.0
    %112 = vmatpush1.msra.mxu0 0.0
    %113 = vmatprep.subr.mxu0 0.0
    %114 = vmatpush1.msra.mxu0 0.0
    %115 = vmatprep.subr.mxu0 0.0
    %116 = vmatpush1.msra.mxu0 0.0
    %117 = vmatprep.subr.mxu0 0.0
    %118 = vmatpush1.msra.mxu0 0.0
    %119 = vmatprep.subr.mxu0 0.0
    %120 = vmatpush1.msra.mxu0 0.0
    %121 = vmatprep.subr.mxu0 0.0
    %122 = vmatpush1.msra.mxu0 0.0
    %123 = vmatprep.subr.mxu0 0.0
    %124 = vmatpush1.msra.mxu0 0.0
    %125 = vmatprep.subr.mxu0 0.0
    %126 = vmatpush1.msra.mxu0 0.0
    %127 = vmatprep.subr.mxu0 0.0
    %128 = vmatpush1.msra.mxu0 0.0
    %129 = vmatprep.subr.mxu0 0.0
    %130 = vmatpush1.msra.mxu0 0.0
    %131 = vmatprep.subr.mxu0 0.0
    %132 = vmatpush1.msra.mxu0 0.0
    %133 = vmatprep.subr.mxu0 0.0
    %134 = vmatpush1.msra.mxu0 0.0
    %135 = vmatprep.subr.mxu0 0.0
    %136 = vmatpush1.msra.mxu0 0.0
    %137 = vmatprep.subr.mxu0 0.0
    %138 = vmatpush1.msra.mxu0 0.0
    %139 = vmatprep.subr.mxu0 0.0
    %140 = vmatpush1.msra.mxu0 0.0
    %141 = vmatprep.subr.mxu0 0.0
    %142 = vmatpush1.msra.mxu0 0.0
    %143 = vmatprep.subr.mxu0 0.0
    %144 = vmatpush1.msra.mxu0 0.0
    %145 = vmatprep.subr.mxu0 0.0
    %146 = vmatpush1.msra.mxu0 0.0
    %147 = vmatprep.mubr.f32.mxu0 0.0
    %148 = vmatmul.mubr.f32.gmra.mrb[0].mxu0 %v71
    %v149 = vpop.f32.mrb[0].mxu0
    %v150 = vadd.f32 %v57, %v149
    %v151 = vpop.f32.mrb[0].mxu0
    %152 = vmatprep.mubr.f32.mxu0 0.0
    %153 = vmatmul.mubr.f32.gmra.mrb[0].mxu0 %v74
    %v154 = vpop.f32.mrb[0].mxu0
    %v155 = vadd.f32 %v62, %v154
    %v156 = vpop.f32.mrb[0].mxu0
    %157 = vmatprep.mubr.f32.mxu0 0.0
    %158 = vmatmul.mubr.f32.gmra.mrb[0].mxu0 %v77
    %v159 = vpop.f32.mrb[0].mxu0
    %v160 = vadd.f32 %v67, %v159
    %v161 = vpop.f32.mrb[0].mxu0
    %162 = vdwg.mxu0
    %v163 = vmax.f32 %v150, 0.0
    %v164 = vmax.f32 %v155, 0.0
    %v165 = vmax.f32 %v160, 0.0
    %s166 = sld [smem:[#allocation5]]
    %v167 = vstv %s166
    %v168 = vadd.f32 %v167, 0.0
    %s169 = sld [smem:[#allocation5 + $0x1]]
    %v170 = vstv %s169
    %v171 = vadd.f32 %v170, 0.0
    %s172 = sld [smem:[#allocation2]]
    %v173 = vstv %s172
    %v174 = vmul.f32 %v173, %v163
    %v175 = vadd.f32 %v168, %v174
    %s176 = sld [smem:[#allocation2 + $0x1]]
    %v177 = vstv %s176
    %v178 = vmul.f32 %v177, %v163
    %v179 = vadd.f32 %v171, %v178
    %s180 = sld [smem:[#allocation2 + $0x2]]
    %v181 = vstv %s180
    %v182 = vmul.f32 %v181, %v163
    %v184 = vrot.slane %v182, 1
    %v186 = vadd.f32 %v175, %v184
    %s187 = sld [smem:[#allocation2 + $0x3]]
    %v188 = vstv %s187
    %v189 = vmul.f32 %v188, %v163
    %v191 = vrot.slane %v189, 1
    %v193 = vadd.f32 %v179, %v191
    %s194 = sld [smem:[#allocation2 + $0x4]]
    %v195 = vstv %s194
    %v196 = vmul.f32 %v195, %v163
    %v198 = vrot.slane %v196, 2
    %v200 = vadd.f32 %v186, %v198
    %s201 = sld [smem:[#allocation2 + $0x5]]
    %v202 = vstv %s201
    %v203 = vmul.f32 %v202, %v163
    %v205 = vrot.slane %v203, 2
    %v207 = vadd.f32 %v193, %v205
    %s208 = sld [smem:[#allocation2 + $0x6]]
    %v209 = vstv %s208
    %v210 = vmul.f32 %v209, %v163
    %v212 = vrot.slane %v210, 3
    %v214 = vadd.f32 %v200, %v212
    %s215 = sld [smem:[#allocation2 + $0x7]]
    %v216 = vstv %s215
    %v217 = vmul.f32 %v216, %v163
    %v219 = vrot.slane %v217, 3
    %v221 = vadd.f32 %v207, %v219
    %s222 = sld [smem:[#allocation2 + $0x8]]
    %v223 = vstv %s222
    %v224 = vmul.f32 %v223, %v163
    %v226 = vrot.slane %v224, 4
    %v228 = vadd.f32 %v214, %v226
    %s229 = sld [smem:[#allocation2 + $0x9]]
    %v230 = vstv %s229
    %v231 = vmul.f32 %v230, %v163
    %v233 = vrot.slane %v231, 4
    %v235 = vadd.f32 %v221, %v233
    %s236 = sld [smem:[#allocation2 + $0xa]]
    %v237 = vstv %s236
    %v238 = vmul.f32 %v237, %v163
    %v240 = vrot.slane %v238, 5
    %v242 = vadd.f32 %v228, %v240
    %s243 = sld [smem:[#allocation2 + $0xb]]
    %v244 = vstv %s243
    %v245 = vmul.f32 %v244, %v163
    %v247 = vrot.slane %v245, 5
    %v249 = vadd.f32 %v235, %v247
    %s250 = sld [smem:[#allocation2 + $0xc]]
    %v251 = vstv %s250
    %v252 = vmul.f32 %v251, %v163
    %v254 = vrot.slane %v252, 6
    %v256 = vadd.f32 %v242, %v254
    %s257 = sld [smem:[#allocation2 + $0xd]]
    %v258 = vstv %s257
    %v259 = vmul.f32 %v258, %v163
    %v261 = vrot.slane %v259, 6
    %v263 = vadd.f32 %v249, %v261
    %s264 = sld [smem:[#allocation2 + $0xe]]
    %v265 = vstv %s264
    %v266 = vmul.f32 %v265, %v163
    %v268 = vrot.slane %v266, 7
    %v270 = vadd.f32 %v256, %v268
    %s271 = sld [smem:[#allocation2 + $0xf]]
    %v272 = vstv %s271
    %v273 = vmul.f32 %v272, %v163
    %v275 = vrot.slane %v273, 7
    %v277 = vadd.f32 %v263, %v275
    %s278 = sld [smem:[#allocation2 + $0x10]]
    %v279 = vstv %s278
    %v280 = vmul.f32 %v279, %v164
    %v281 = vadd.f32 %v270, %v280
    %s282 = sld [smem:[#allocation2 + $0x11]]
    %v283 = vstv %s282
    %v284 = vmul.f32 %v283, %v164
    %v285 = vadd.f32 %v277, %v284
    %s286 = sld [smem:[#allocation2 + $0x12]]
    %v287 = vstv %s286
    %v288 = vmul.f32 %v287, %v164
    %v290 = vrot.slane %v288, 1
    %v292 = vadd.f32 %v281, %v290
    %s293 = sld [smem:[#allocation2 + $0x13]]
    %v294 = vstv %s293
    %v295 = vmul.f32 %v294, %v164
    %v297 = vrot.slane %v295, 1
    %v299 = vadd.f32 %v285, %v297
    %s300 = sld [smem:[#allocation2 + $0x14]]
    %v301 = vstv %s300
    %v302 = vmul.f32 %v301, %v164
    %v304 = vrot.slane %v302, 2
    %v306 = vadd.f32 %v292, %v304
    %s307 = sld [smem:[#allocation2 + $0x15]]
    %v308 = vstv %s307
    %v309 = vmul.f32 %v308, %v164
    %v311 = vrot.slane %v309, 2
    %v313 = vadd.f32 %v299, %v311
    %s314 = sld [smem:[#allocation2 + $0x16]]
    %v315 = vstv %s314
    %v316 = vmul.f32 %v315, %v164
    %v318 = vrot.slane %v316, 3
    %v320 = vadd.f32 %v306, %v318
    %s321 = sld [smem:[#allocation2 + $0x17]]
    %v322 = vstv %s321
    %v323 = vmul.f32 %v322, %v164
    %v325 = vrot.slane %v323, 3
    %v327 = vadd.f32 %v313, %v325
    %s328 = sld [smem:[#allocation2 + $0x18]]
    %v329 = vstv %s328
    %v330 = vmul.f32 %v329, %v164
    %v332 = vrot.slane %v330, 4
    %v334 = vadd.f32 %v320, %v332
    %s335 = sld [smem:[#allocation2 + $0x19]]
    %v336 = vstv %s335
    %v337 = vmul.f32 %v336, %v164
    %v339 = vrot.slane %v337, 4
    %v341 = vadd.f32 %v327, %v339
    %s342 = sld [smem:[#allocation2 + $0x1a]]
    %v343 = vstv %s342
    %v344 = vmul.f32 %v343, %v164
    %v346 = vrot.slane %v344, 5
    %v348 = vadd.f32 %v334, %v346
    %s349 = sld [smem:[#allocation2 + $0x1b]]
    %v350 = vstv %s349
    %v351 = vmul.f32 %v350, %v164
    %v353 = vrot.slane %v351, 5
    %v355 = vadd.f32 %v341, %v353
    %s356 = sld [smem:[#allocation2 + $0x1c]]
    %v357 = vstv %s356
    %v358 = vmul.f32 %v357, %v164
    %v360 = vrot.slane %v358, 6
    %v362 = vadd.f32 %v348, %v360
    %s363 = sld [smem:[#allocation2 + $0x1d]]
    %v364 = vstv %s363
    %v365 = vmul.f32 %v364, %v164
    %v367 = vrot.slane %v365, 6
    %v369 = vadd.f32 %v355, %v367
    %s370 = sld [smem:[#allocation2 + $0x1e]]
    %v371 = vstv %s370
    %v372 = vmul.f32 %v371, %v164
    %v374 = vrot.slane %v372, 7
    %v376 = vadd.f32 %v362, %v374
    %s377 = sld [smem:[#allocation2 + $0x1f]]
    %v378 = vstv %s377
    %v379 = vmul.f32 %v378, %v164
    %v381 = vrot.slane %v379, 7
    %v383 = vadd.f32 %v369, %v381
    %s384 = sld [smem:[#allocation2 + $0x20]]
    %v385 = vstv %s384
    %v386 = vmul.f32 %v385, %v165
    %v387 = vadd.f32 %v376, %v386
    %s388 = sld [smem:[#allocation2 + $0x21]]
    %v389 = vstv %s388
    %v390 = vmul.f32 %v389, %v165
    %v391 = vadd.f32 %v383, %v390
    %s392 = sld [smem:[#allocation2 + $0x22]]
    %v393 = vstv %s392
    %v394 = vmul.f32 %v393, %v165
    %v396 = vrot.slane %v394, 1
    %v398 = vadd.f32 %v387, %v396
    %s399 = sld [smem:[#allocation2 + $0x23]]
    %v400 = vstv %s399
    %v401 = vmul.f32 %v400, %v165
    %v403 = vrot.slane %v401, 1
    %v405 = vadd.f32 %v391, %v403
    %s406 = sld [smem:[#allocation2 + $0x24]]
    %v407 = vstv %s406
    %v408 = vmul.f32 %v407, %v165
    %v410 = vrot.slane %v408, 2
    %v412 = vadd.f32 %v398, %v410
    %s413 = sld [smem:[#allocation2 + $0x25]]
    %v414 = vstv %s413
    %v415 = vmul.f32 %v414, %v165
    %v417 = vrot.slane %v415, 2
    %v419 = vadd.f32 %v405, %v417
    %s420 = sld [smem:[#allocation2 + $0x26]]
    %v421 = vstv %s420
    %v422 = vmul.f32 %v421, %v165
    %v424 = vrot.slane %v422, 3
    %v426 = vadd.f32 %v412, %v424
    %s427 = sld [smem:[#allocation2 + $0x27]]
    %v428 = vstv %s427
    %v429 = vmul.f32 %v428, %v165
    %v431 = vrot.slane %v429, 3
    %v433 = vadd.f32 %v419, %v431
    %v434 = vmax.f32 %v426, %v433
    %v435 = vsub.f32 %v426, %v434
    %v436 = vsub.f32 %v433, %v434
    %v437 = vmul.f32 %v435, 1.442695
    %v438 = vpow.pop %v437
    %v439 = vmul.f32 %v436, 1.442695
    %v440 = vpow.pop %v439
    %v441 = vadd.f32 %v438, %v440
    %v442 = vlog2.pop %v441
    %v443 = vmul.f32 %v442, 0.6931472
    %v444 = vsub.f32 %v435, %v443
    %v445 = vsub.f32 %v436, %v443
    %v447 = vrot.slane %v445, 7
    %vm449 = vcmask 1040384
    %v450 = vsel %vm449, %v444, %v447
    %451 = vst [vmem:[#allocation7] sm:$0x3] %v450
    // Predicated region
    $region30: #{tpu_custom_call.1} parent=1 // pred_check
      _
    $region31: #{tpu_custom_call.1} parent=1 // pred_check_branch
      %453 = sbr.rel (0) target = $region33
    $region32: #{tpu_custom_call.1} parent=1 // pred_region
      %s455 = ssub.s32 32, 32
      %456 = vsyncadd [#allocation3], %s455
      %s458 = sshll.u32 [#allocation7], 4
      %s459 = int_to_ptr.vmem [resolvable:$true] %s458
      %461 = dma.vmem_to_hbm [thread:$0]  %s459, 32, %s5, [#allocation3]
    $region33: #{tpu_custom_call.1} parent=1 // pred_fallthru
      _
    // Predicated region
    $region34: #{tpu_custom_call.1} parent=1 // pred_check
      _
    $region35: #{tpu_custom_call.1} parent=1 // pred_check_branch
      %463 = sbr.rel (0) target = $region37
    $region36: #{tpu_custom_call.1} parent=1 // pred_region
      %464 = dma.done [#allocation3], 32
    $region37: #{tpu_custom_call.1} parent=1 // pred_fallthru
      _
    %465 = vsyncpa [#allocation3], 1
    %466 = vsyncpa [#allocation4], 1
    %467 = vsyncpa [#allocation6], 1

</llo_original>
